<compile_context>
chip_gen: v7x
topology: tpu7x:2x2x1
jax: 0.10.0
libtpu: 0.0.40
codegen_flags: <defaults>
</compile_context>

<pallas_src>
import functools

import jax
import jax.numpy as jnp
from jax.experimental import pallas as pl
from jax.experimental.pallas import tpu as pltpu


def _round_up(a: int, b: int) -> int:
    return ((a + b - 1) // b) * b


def _mlm_header_kernel(x_ref, w_ref, b_ref, o_ref, bm_ref, bl_ref, *, tn, num_j):
    # x_ref:  (tm, E)      matmul dtype
    # w_ref:  (E, tn)      matmul dtype (pre-transposed weight slab)
    # b_ref:  (1, tn)      f32 bias slice (padded vocab columns hold -1e30)
    # o_ref:  (tm, Vp)     out dtype — resident across the vocab grid axis
    # bm_ref: (tm, num_j)  f32 per-vocab-block max
    # bl_ref: (tm, num_j)  f32 per-vocab-block sum(exp(logits - block max))
    j = pl.program_id(1)

    @pl.when(j == 0)
    def _init():
        bm_ref[...] = jnp.full_like(bm_ref, -1e30)
        bl_ref[...] = jnp.zeros_like(bl_ref)

    # (tm, tn) logits block on the MXU with f32 accumulation, + bias (f32).
    blk = jnp.dot(x_ref[...], w_ref[...], preferred_element_type=jnp.float32)
    blk = blk + b_ref[...]

    # Streaming softmax bookkeeping for this block.
    m_j = jnp.max(blk, axis=-1, keepdims=True)          # (tm, 1)
    e = jnp.exp(blk - m_j)                              # (tm, tn) unnormalized
    l_j = jnp.sum(e, axis=-1, keepdims=True)            # (tm, 1)

    # Record (m_j, l_j) in column j of the tiny scratches via a one-hot select
    # (avoids unaligned dynamic lane-dimension stores).
    col = jax.lax.broadcasted_iota(jnp.int32, bm_ref.shape, 1)
    hit = col == j
    bm_ref[...] = jnp.where(hit, m_j, bm_ref[...])
    bl_ref[...] = jnp.where(hit, l_j, bl_ref[...])

    # Write the unnormalized exp block straight into the resident output.
    start = pl.multiple_of(j * tn, tn)
    o_ref[:, pl.ds(start, tn)] = e.astype(o_ref.dtype)

    @pl.when(j == num_j - 1)
    def _finalize():
        bm = bm_ref[...]                                 # (tm, num_j)
        bl = bl_ref[...]
        m_g = jnp.max(bm, axis=-1, keepdims=True)        # (tm, 1) global max
        denom = jnp.sum(bl * jnp.exp(bm - m_g), axis=-1, keepdims=True)
        inv = 1.0 / denom                                # exact, tiny vector
        # One VPU rescale pass per block (statically unrolled over num_j).
        for jj in range(num_j):
            off = jj * tn
            scale = jnp.exp(bm[:, jj:jj + 1] - m_g) * inv        # (tm, 1)
            o_blk = o_ref[:, off:off + tn].astype(jnp.float32)
            o_ref[:, off:off + tn] = (o_blk * scale).astype(o_ref.dtype)


def mlm_header(x, weight, bias, *, tm=512, tn=512,
               matmul_dtype=jnp.bfloat16, out_dtype=None, vmem_frac=0.8):
    """softmax(x @ weight.T + bias, axis=-1).

    x: [B, S, E]; weight: [V, E] (PyTorch nn.Linear layout); bias: [V].
    """
    B, S, E = x.shape
    V, E2 = weight.shape
    assert E == E2, "weight must be (num_of_tokens, embedding_size)"
    M = B * S
    out_dtype = x.dtype if out_dtype is None else jnp.dtype(out_dtype)
    in_b = jnp.dtype(matmul_dtype).itemsize
    out_b = jnp.dtype(out_dtype).itemsize

    # Row-tile alignment: 8 sublanes for 4-byte, 16 for bf16, 32 for 1-byte.
    m_align = max(8, 32 // in_b)

    # ---- vocab tiling --------------------------------------------------------
    # Prefer Vp == V whenever V is a multiple of 128 (true for most real
    # vocabularies): pick tn as the largest multiple of 128 <= tn_target that
    # divides V -> no padded columns, no padded-output slice copy on return.
    tn_target = max(128, (int(tn) // 128) * 128)
    tn_target = min(tn_target, _round_up(V, 128))
    if V % 128 == 0:
        tn = 128
        for cand in range(tn_target, 127, -128):
            if V % cand == 0:
                tn = cand
                break
        Vp = V
    else:
        tn = tn_target
        Vp = _round_up(V, tn)
    num_j = Vp // tn

    # ---- row tiling sized against the real VMEM capacity ---------------------
    tm = max(m_align, (int(tm) // m_align) * m_align)
    tm = min(tm, _round_up(M, m_align))

    try:
        vmem_cap = int(pltpu.get_tpu_info().vmem_capacity_bytes)
    except Exception:
        vmem_cap = 64 * 1024 * 1024        # conservative: v7x per-TensorCore

    def vmem_need(tm_):
        return (2 * tm_ * Vp * out_b       # resident output block (dbl-buffered)
                + 2 * tm_ * E * in_b       # x tile (dbl-buffered)
                + 2 * E * tn * in_b        # weight tile (dbl-buffered)
                + 2 * tn * 4               # bias tile
                + 2 * tm_ * num_j * 4      # bm/bl scratches
                + (2 << 20))               # Mosaic internal scratch slack

    budget = int(vmem_frac * vmem_cap)
    while tm > m_align and vmem_need(tm) > budget:
        tm = max(m_align, ((tm // 2) // m_align) * m_align)
    # TODO(synk): very large vocabularies (V >~ 100k) on 64 MiB VMEM want a
    # two-pass vocab scheme (pass 1: running max/sum only; pass 2: normalized
    # (tm, tn) output blocks indexed (i, j)) instead of a resident (tm, Vp) row.
    Mp = _round_up(M, tm)

    # ---- operand prep ---------------------------------------------------------
    x2d = x.reshape(M, E)
    if Mp != M:
        x2d = jnp.pad(x2d, ((0, Mp - M), (0, 0)))
    x2d = x2d.astype(matmul_dtype)

    # One-time (V, E) -> (E, Vp) transpose so the kernel is a plain (m,k)x(k,n)
    # MXU contraction (no per-step transpose of the weight tile).
    wT = weight.T
    if Vp != V:
        wT = jnp.pad(wT, ((0, 0), (0, Vp - V)))
    wT = wT.astype(matmul_dtype)

    # Bias in f32; padded vocab columns get a huge negative logit -> prob 0.
    b2d = bias.astype(jnp.float32).reshape(1, V)
    if Vp != V:
        b2d = jnp.pad(b2d, ((0, 0), (0, Vp - V)), constant_values=-1e30)

    vmem_limit = int(min(vmem_cap,
                         max(32 * 1024 * 1024, vmem_need(tm) + (4 << 20))))

    kernel = functools.partial(_mlm_header_kernel, tn=tn, num_j=num_j)

    out = pl.pallas_call(
        kernel,
        out_shape=jax.ShapeDtypeStruct((Mp, Vp), out_dtype),
        grid_spec=pltpu.PrefetchScalarGridSpec(
            num_scalar_prefetch=0,
            grid=(Mp // tm, Vp // tn),
            in_specs=[
                pl.BlockSpec((tm, E), lambda i, j: (i, 0)),    # row tile of x
                pl.BlockSpec((E, tn), lambda i, j: (0, j)),    # vocab cols of W^T
                pl.BlockSpec((1, tn), lambda i, j: (0, j)),    # bias slice
            ],
            out_specs=pl.BlockSpec((tm, Vp), lambda i, j: (i, 0)),
            scratch_shapes=[
                pltpu.VMEM((tm, num_j), jnp.float32),          # per-block maxes
                pltpu.VMEM((tm, num_j), jnp.float32),          # per-block sums
            ],
        ),
        compiler_params=pltpu.CompilerParams(
            dimension_semantics=("parallel", "arbitrary"),
            vmem_limit_bytes=vmem_limit,
        ),
    )(x2d, wT, b2d)

    if Mp != M or Vp != V:
        out = out[:M, :V]
    return out.reshape(B, S, V)


if __name__ == "__main__":
    # Small, MLM-style shapes: batch=2, seq=8, embedding=32, vocab=128.
    B, S, E, V = 2, 8, 32, 128

    key = jax.random.PRNGKey(0)
    kx, kw, kb = jax.random.split(key, 3)

    # Deterministic init matching nn.Linear's U(-1/sqrt(E), 1/sqrt(E)).
    bound = 1.0 / (E ** 0.5)
    weight = jax.random.uniform(kw, (V, E), jnp.float32, -bound, bound)
    bias = jax.random.uniform(kb, (V,), jnp.float32, -bound, bound)
    x = jax.random.normal(kx, (B, S, E), jnp.float32)

    ref = jax.nn.softmax(x @ weight.T + bias, axis=-1)

    # f32 matmul path — tight check (exact divide in the finalize).
    out = mlm_header(x, weight, bias, matmul_dtype=jnp.float32)
    out = jax.block_until_ready(out)
    assert out.shape == (B, S, V)
    assert jnp.allclose(out, ref, atol=1e-4, rtol=5e-3), \
        float(jnp.max(jnp.abs(out - ref)))
    assert jnp.allclose(out.sum(-1), 1.0, atol=1e-3)

    # bf16 matmul path (default, halves weight HBM traffic) — loose check.
    out_bf16 = jax.block_until_ready(mlm_header(x, weight, bias))
    assert out_bf16.shape == (B, S, V)
    assert jnp.allclose(out_bf16, ref, atol=2e-2, rtol=2e-2), \
        float(jnp.max(jnp.abs(out_bf16 - ref)))

    print("KERNEL_OK")
</pallas_src>

<mosaic_0001>
module attributes {stable_mosaic.version = 11 : i64} {
  func.func @_mlm_header_kernel(%arg0: i32, %arg1: i32, %arg2: memref<16x32xf32, #tpu.memory_space<vmem>>, %arg3: memref<32x128xf32, #tpu.memory_space<vmem>>, %arg4: memref<1x128xf32, #tpu.memory_space<vmem>>, %arg5: memref<16x128xf32, #tpu.memory_space<vmem>>, %arg6: memref<16x1xf32, #tpu.memory_space<vmem>>, %arg7: memref<16x1xf32, #tpu.memory_space<vmem>>) attributes {dimension_semantics = [#tpu.dimension_semantics<parallel>, #tpu.dimension_semantics<arbitrary>], iteration_bounds = array<i64: 1, 1>, scalar_prefetch = 0 : i64, scratch_operands = 2 : i64, tpu.core_type = #tpu.core_type<tc>, window_params = [{transform_indices = @transform_0, window_bounds = array<i64: 16, 32>}, {transform_indices = @transform_1, window_bounds = array<i64: 32, 128>}, {transform_indices = @transform_2, window_bounds = array<i64: 1, 128>}, {transform_indices = @transform_3, window_bounds = array<i64: 16, 128>}]} {
    %c0_i32 = arith.constant 0 : i32
    %0 = arith.cmpi eq, %arg1, %c0_i32 : i32
    %1 = arith.extui %0 : i1 to i32
    %c0_i32_0 = arith.constant 0 : i32
    %2 = arith.cmpi ne, %1, %c0_i32_0 : i32
    scf.if %2 {
      %cst_19 = arith.constant -1.000000e+30 : f32
      %32 = vector.broadcast %cst_19 : f32 to vector<16x1xf32>
      %c0_20 = arith.constant 0 : index
      %c0_21 = arith.constant 0 : index
      %33 = vector.load %arg6[%c0_20, %c0_21] : memref<16x1xf32, #tpu.memory_space<vmem>>, vector<16x1xf32>
      tpu.vector_store %arg6[%c0_20, %c0_21], %32 {strides = array<i32>} : memref<16x1xf32, #tpu.memory_space<vmem>>, vector<16x1xf32>,
      %cst_22 = arith.constant 0.000000e+00 : f32
      %34 = vector.broadcast %cst_22 : f32 to vector<16x1xf32>
      %c0_23 = arith.constant 0 : index
      %c0_24 = arith.constant 0 : index
      %35 = vector.load %arg7[%c0_23, %c0_24] : memref<16x1xf32, #tpu.memory_space<vmem>>, vector<16x1xf32>
      tpu.vector_store %arg7[%c0_23, %c0_24], %34 {strides = array<i32>} : memref<16x1xf32, #tpu.memory_space<vmem>>, vector<16x1xf32>,
    } else {
    }
    %c0 = arith.constant 0 : index
    %c0_1 = arith.constant 0 : index
    %3 = vector.load %arg2[%c0, %c0_1] : memref<16x32xf32, #tpu.memory_space<vmem>>, vector<16x32xf32>
    %c0_2 = arith.constant 0 : index
    %c0_3 = arith.constant 0 : index
    %4 = vector.load %arg3[%c0_2, %c0_3] : memref<32x128xf32, #tpu.memory_space<vmem>>, vector<32x128xf32>
    %cst = arith.constant dense<0.000000e+00> : vector<16x128xf32>
    %5 = tpu.matmul %3, %4, %cst {dimension_numbers = #tpu.dot_dimension_numbers<[1], [0], [0], [1], [0, 0, 1, 1], [], []>} : vector<16x32xf32>, vector<32x128xf32>, vector<16x128xf32> -> vector<16x128xf32>
    %c0_4 = arith.constant 0 : index
    %c0_5 = arith.constant 0 : index
    %6 = vector.load %arg4[%c0_4, %c0_5] : memref<1x128xf32, #tpu.memory_space<vmem>>, vector<1x128xf32>
    %7 = vector.broadcast %6 : vector<1x128xf32> to vector<16x128xf32>
    %8 = arith.addf %5, %7 : vector<16x128xf32>
    %cst_6 = arith.constant dense<0xFF800000> : vector<16xf32>
    %9 = vector.multi_reduction <maximumf>, %8, %cst_6 [1] : vector<16x128xf32> to vector<16xf32>
    %10 = vector.shape_cast %9 : vector<16xf32> to vector<16x1xf32>
    %11 = vector.broadcast %10 : vector<16x1xf32> to vector<16x128xf32>
    %12 = arith.subf %8, %11 : vector<16x128xf32>
    %13 = math.exp %12 : vector<16x128xf32>
    %cst_7 = arith.constant dense<0.000000e+00> : vector<16xf32>
    %14 = vector.multi_reduction <add>, %13, %cst_7 [1] : vector<16x128xf32> to vector<16xf32>
    %15 = vector.shape_cast %14 : vector<16xf32> to vector<16x1xf32>
    %16 = tpu.iota {dimensions = array<i32: 1>} : vector<16x1xi32>
    %17 = vector.broadcast %arg1 : i32 to vector<16x1xi32>
    %18 = arith.cmpi eq, %16, %17 : vector<16x1xi32>
    %c0_8 = arith.constant 0 : index
    %c0_9 = arith.constant 0 : index
    %19 = vector.load %arg6[%c0_8, %c0_9] : memref<16x1xf32, #tpu.memory_space<vmem>>, vector<16x1xf32>
    %20 = arith.select %18, %10, %19 : vector<16x1xi1>, vector<16x1xf32>
    %c0_10 = arith.constant 0 : index
    %c0_11 = arith.constant 0 : index
    %21 = vector.load %arg6[%c0_10, %c0_11] : memref<16x1xf32, #tpu.memory_space<vmem>>, vector<16x1xf32>
    tpu.vector_store %arg6[%c0_10, %c0_11], %20 {strides = array<i32>} : memref<16x1xf32, #tpu.memory_space<vmem>>, vector<16x1xf32>,
    %c0_12 = arith.constant 0 : index
    %c0_13 = arith.constant 0 : index
    %22 = vector.load %arg7[%c0_12, %c0_13] : memref<16x1xf32, #tpu.memory_space<vmem>>, vector<16x1xf32>
    %23 = arith.select %18, %15, %22 : vector<16x1xi1>, vector<16x1xf32>
    %c0_14 = arith.constant 0 : index
    %c0_15 = arith.constant 0 : index
    %24 = vector.load %arg7[%c0_14, %c0_15] : memref<16x1xf32, #tpu.memory_space<vmem>>, vector<16x1xf32>
    tpu.vector_store %arg7[%c0_14, %c0_15], %23 {strides = array<i32>} : memref<16x1xf32, #tpu.memory_space<vmem>>, vector<16x1xf32>,
    %c128_i32 = arith.constant 128 : i32
    %25 = arith.muli %arg1, %c128_i32 : i32
    %26 = tpu.assume_multiple %25, 128 : i32
    %c0_16 = arith.constant 0 : index
    %27 = arith.index_cast %26 : i32 to index
    %28 = vector.load %arg5[%c0_16, %27] : memref<16x128xf32, #tpu.memory_space<vmem>>, vector<16x128xf32>
    tpu.vector_store %arg5[%c0_16, %27], %13 {strides = array<i32>} : memref<16x128xf32, #tpu.memory_space<vmem>>, vector<16x128xf32>,
    %c0_i32_17 = arith.constant 0 : i32
    %29 = arith.cmpi eq, %arg1, %c0_i32_17 : i32
    %30 = arith.extui %29 : i1 to i32
    %c0_i32_18 = arith.constant 0 : i32
    %31 = arith.cmpi ne, %30, %c0_i32_18 : i32
    scf.if %31 {
      %c0_19 = arith.constant 0 : index
      %c0_20 = arith.constant 0 : index
      %32 = vector.load %arg6[%c0_19, %c0_20] : memref<16x1xf32, #tpu.memory_space<vmem>>, vector<16x1xf32>
      %c0_21 = arith.constant 0 : index
      %c0_22 = arith.constant 0 : index
      %33 = vector.load %arg7[%c0_21, %c0_22] : memref<16x1xf32, #tpu.memory_space<vmem>>, vector<16x1xf32>
      %cst_23 = arith.constant dense<0xFF800000> : vector<16xf32>
      %34 = vector.multi_reduction <maximumf>, %32, %cst_23 [1] : vector<16x1xf32> to vector<16xf32>
      %35 = vector.shape_cast %34 : vector<16xf32> to vector<16x1xf32>
      %36 = arith.subf %32, %35 : vector<16x1xf32>
      %37 = math.exp %36 : vector<16x1xf32>
      %38 = arith.mulf %33, %37 : vector<16x1xf32>
      %cst_24 = arith.constant dense<0.000000e+00> : vector<16xf32>
      %39 = vector.multi_reduction <add>, %38, %cst_24 [1] : vector<16x1xf32> to vector<16xf32>
      %40 = vector.shape_cast %39 : vector<16xf32> to vector<16x1xf32>
      %cst_25 = arith.constant 1.000000e+00 : f32
      %41 = vector.broadcast %cst_25 : f32 to vector<16x1xf32>
      %42 = arith.divf %41, %40 : vector<16x1xf32>
      %43 = arith.subf %32, %35 : vector<16x1xf32>
      %44 = math.exp %43 : vector<16x1xf32>
      %45 = arith.mulf %44, %42 : vector<16x1xf32>
      %c0_26 = arith.constant 0 : index
      %c0_27 = arith.constant 0 : index
      %46 = vector.load %arg5[%c0_26, %c0_27] : memref<16x128xf32, #tpu.memory_space<vmem>>, vector<16x128xf32>
      %47 = vector.broadcast %45 : vector<16x1xf32> to vector<16x128xf32>
      %48 = arith.mulf %46, %47 : vector<16x128xf32>
      %c0_28 = arith.constant 0 : index
      %c0_29 = arith.constant 0 : index
      %49 = vector.load %arg5[%c0_28, %c0_29] : memref<16x128xf32, #tpu.memory_space<vmem>>, vector<16x128xf32>
      tpu.vector_store %arg5[%c0_28, %c0_29], %48 {strides = array<i32>} : memref<16x128xf32, #tpu.memory_space<vmem>>, vector<16x128xf32>,
    } else {
    }
    return
  }
  func.func @transform_0(%arg0: i32, %arg1: i32) -> (i32, i32) {
    %c0_i32 = arith.constant 0 : i32
    %c0_i32_0 = arith.constant 0 : i32
    return %arg0, %c0_i32 : i32, i32
  }
  func.func @transform_1(%arg0: i32, %arg1: i32) -> (i32, i32) {
    %c0_i32 = arith.constant 0 : i32
    %c0_i32_0 = arith.constant 0 : i32
    return %c0_i32, %arg1 : i32, i32
  }
  func.func @transform_2(%arg0: i32, %arg1: i32) -> (i32, i32) {
    %c0_i32 = arith.constant 0 : i32
    %c0_i32_0 = arith.constant 0 : i32
    return %c0_i32, %arg1 : i32, i32
  }
  func.func @transform_3(%arg0: i32, %arg1: i32) -> (i32, i32) {
    %c0_i32 = arith.constant 0 : i32
    %c0_i32_0 = arith.constant 0 : i32
    return %arg0, %c0_i32 : i32, i32
  }
}

</mosaic_0001>

<llo_original>
// kernel: tpu_custom_call.1
$region0: #{tpu_custom_call.1}
  #allocation0 [shape = 'u32[]', space=smem, size = 0x4, offset = 0x4, fixed_abs, tag = 'smem constant byte address 0x4 - core index']
  #allocation1 [shape = 'u32[144,128]{1,0:T(1,128)}', space=vmem, size = 0x12000, scoped, tag = 'internal scratch']
  #allocation2 [shape = 'f32[16,1]{1,0:T(8,128)}', space=vmem, size = 0x2000, scoped, tag = 'scratch operand']
  #allocation3 [shape = 'f32[16,1]{1,0:T(8,128)}', space=vmem, size = 0x2000, scoped, tag = 'scratch operand']
  %s0 = inlined_call_operand.hbm [shape: f32[16,32], index: 0, kind: input, shape index: {}]
  %s1 = inlined_call_operand.hbm [shape: f32[32,128], index: 1, kind: input, shape index: {}]
  %s2 = inlined_call_operand.vmem [shape: f32[1,128], index: 2, kind: input, shape index: {}]
  %s3 = inlined_call_operand.hbm [shape: f32[16,128], index: 3, kind: output, shape index: {}]
  %s4 = sld [smem:[#allocation0]]
  $region38: #{tpu_custom_call.1} parent=0
    _
  %s6 = ssub.s32 1, %s4
  %s7 = scalar_select 0, %s6, %s4
  $region1: #{tpu_custom_call.1} parent=0
    #allocation4 [shape = 'u8[8192]{0}', space=vmem, size = 0x2000, scoped, tag = 'input window, operand 0, single buffered']
    #allocation5 [shape = 's32[1]{0}', space=sflag, size = 0x4, scoped, tag = 'scoped memory for tpu_custom_call.1']
    #allocation6 [shape = 's32[1]{0}', space=sflag, size = 0x4, scoped, tag = 'scoped memory for tpu_custom_call.1']
    #allocation7 [shape = 'u8[16384]{0}', space=vmem, size = 0x4000, scoped, tag = 'input window, operand 1, single buffered']
    #allocation8 [shape = 's32[1]{0}', space=sflag, size = 0x4, scoped, tag = 'scoped memory for tpu_custom_call.1']
    #allocation9 [shape = 'u8[8192]{0}', space=vmem, size = 0x2000, scoped, tag = 'output window, operand 0, single buffered']
    %8 = vsyncpa [#allocation5], 0
    %9 = vsyncpa [#allocation8], 0
    %10 = vsyncpa [#allocation6], 0
    // Predicated region
    $region2: #{tpu_custom_call.1} parent=1 // pred_check
      _
    $region3: #{tpu_custom_call.1} parent=1 // pred_check_branch
      %12 = sbr.rel (0) target = $region5
    $region4: #{tpu_custom_call.1} parent=1 // pred_region
      %s14 = ssub.s32 256, 256
      %15 = vsyncadd [#allocation5], %s14
      %s16 = sshll.u32 [#allocation4], 4
      %s17 = int_to_ptr.vmem [resolvable:$true] %s16
      %22 = dma.hbm_to_vmem [thread:$0]  %s0, 256, %s17, [#allocation5], 128, 128, 8
    $region5: #{tpu_custom_call.1} parent=1 // pred_fallthru
      _
    // Predicated region
    $region6: #{tpu_custom_call.1} parent=1 // pred_check
      _
    $region7: #{tpu_custom_call.1} parent=1 // pred_check_branch
      %24 = sbr.rel (0) target = $region9
    $region8: #{tpu_custom_call.1} parent=1 // pred_region
      %s26 = ssub.s32 512, 512
      %27 = vsyncadd [#allocation8], %s26
      %s28 = sshll.u32 [#allocation7], 4
      %s29 = int_to_ptr.vmem [resolvable:$true] %s28
      %34 = dma.hbm_to_vmem [thread:$0]  %s1, 512, %s29, [#allocation8], 128, 128, 8
    $region9: #{tpu_custom_call.1} parent=1 // pred_fallthru
      _
    // Predicated region
    $region10: #{tpu_custom_call.1} parent=1 // pred_check
      _
    $region11: #{tpu_custom_call.1} parent=1 // pred_check_branch
      %36 = sbr.rel (0) target = $region13
    $region12: #{tpu_custom_call.1} parent=1 // pred_region
      _
    $region13: #{tpu_custom_call.1} parent=1 // pred_fallthru
      _
    // Predicated region
    $region14: #{tpu_custom_call.1} parent=1 // pred_check
      _
    $region15: #{tpu_custom_call.1} parent=1 // pred_check_branch
      %38 = sbr.rel (0) target = $region17
    $region16: #{tpu_custom_call.1} parent=1 // pred_region
      %39 = dma.done [#allocation5], 256
    $region17: #{tpu_custom_call.1} parent=1 // pred_fallthru
      _
    // Predicated region
    $region18: #{tpu_custom_call.1} parent=1 // pred_check
      _
    $region19: #{tpu_custom_call.1} parent=1 // pred_check_branch
      %41 = sbr.rel (0) target = $region21
    $region20: #{tpu_custom_call.1} parent=1 // pred_region
      %42 = dma.done [#allocation8], 512
    $region21: #{tpu_custom_call.1} parent=1 // pred_fallthru
      _
    %p43 = scmp.eq.s32.totalorder 0, 0
    // Predicated region
    $region22: #{tpu_custom_call.1} parent=1 // pred_check
      %p44 = pneg %p43
    $region23: #{tpu_custom_call.1} parent=1 // pred_check_branch
      %46 = sbr.rel (%p44) target = $region25
    $region24: #{tpu_custom_call.1} parent=1 // pred_region
      %vm47 = vcmask 7168
      %48 = vst.msk [vmem:[#allocation2] sm:$0xff] %vm47, -1e+30
      %49 = vst.msk [vmem:[#allocation2 + $0x8] sm:$0xff] %vm47, -1e+30
      %50 = vst.msk [vmem:[#allocation3] sm:$0xff] %vm47, 0.0
      %51 = vst.msk [vmem:[#allocation3 + $0x8] sm:$0xff] %vm47, 0.0
    $region25: #{tpu_custom_call.1} parent=1 // pred_fallthru
      _
    %v52 = vld [vmem:[#allocation4] sm:$0xff]
    %v53 = vld [vmem:[#allocation4 + $0x8] sm:$0xff]
    %v54 = vld [vmem:[#allocation7] sm:$0xff]
    %v55 = vld [vmem:[#allocation7 + $0x8] sm:$0xff]
    %v56 = vld [vmem:[#allocation7 + $0x10] sm:$0xff]
    %v57 = vld [vmem:[#allocation7 + $0x18] sm:$0xff]
    %v58 = vld [vmem:[%s2] sm:$0x1]
    %v60 = vlaneseq
    %v61 = vshrl.u32 %v60, 7
    %v62 = vsub.s32 0, %v61
    %v63 = vrot.slane %v58, %v62
    %vm65 = vcmask 261120
    %v67 = vsel %vm65, %v52, 0
    %v70 = vsel %vm65, %v53, 0
    %72 = vmatprep.subr.mxu0 0.0
    %73 = vmatpush1.msra.mxu0 %v54
    %74 = vmatprep.subr.mxu0 0.0
    %75 = vmatpush1.msra.mxu0 %v55
    %76 = vmatprep.subr.mxu0 0.0
    %77 = vmatpush1.msra.mxu0 %v56
    %78 = vmatprep.subr.mxu0 0.0
    %79 = vmatpush1.msra.mxu0 %v57
    %80 = vmatprep.subr.mxu0 0.0
    %81 = vmatpush1.msra.mxu0 0.0
    %82 = vmatprep.subr.mxu0 0.0
    %83 = vmatpush1.msra.mxu0 0.0
    %84 = vmatprep.subr.mxu0 0.0
    %85 = vmatpush1.msra.mxu0 0.0
    %86 = vmatprep.subr.mxu0 0.0
    %87 = vmatpush1.msra.mxu0 0.0
    %88 = vmatprep.subr.mxu0 0.0
    %89 = vmatpush1.msra.mxu0 0.0
    %90 = vmatprep.subr.mxu0 0.0
    %91 = vmatpush1.msra.mxu0 0.0
    %92 = vmatprep.subr.mxu0 0.0
    %93 = vmatpush1.msra.mxu0 0.0
    %94 = vmatprep.subr.mxu0 0.0
    %95 = vmatpush1.msra.mxu0 0.0
    %96 = vmatprep.subr.mxu0 0.0
    %97 = vmatpush1.msra.mxu0 0.0
    %98 = vmatprep.subr.mxu0 0.0
    %99 = vmatpush1.msra.mxu0 0.0
    %100 = vmatprep.subr.mxu0 0.0
    %101 = vmatpush1.msra.mxu0 0.0
    %102 = vmatprep.subr.mxu0 0.0
    %103 = vmatpush1.msra.mxu0 0.0
    %104 = vmatprep.subr.mxu0 0.0
    %105 = vmatpush1.msra.mxu0 0.0
    %106 = vmatprep.subr.mxu0 0.0
    %107 = vmatpush1.msra.mxu0 0.0
    %108 = vmatprep.subr.mxu0 0.0
    %109 = vmatpush1.msra.mxu0 0.0
    %110 = vmatprep.subr.mxu0 0.0
    %111 = vmatpush1.msra.mxu0 0.0
    %112 = vmatprep.subr.mxu0 0.0
    %113 = vmatpush1.msra.mxu0 0.0
    %114 = vmatprep.subr.mxu0 0.0
    %115 = vmatpush1.msra.mxu0 0.0
    %116 = vmatprep.subr.mxu0 0.0
    %117 = vmatpush1.msra.mxu0 0.0
    %118 = vmatprep.subr.mxu0 0.0
    %119 = vmatpush1.msra.mxu0 0.0
    %120 = vmatprep.subr.mxu0 0.0
    %121 = vmatpush1.msra.mxu0 0.0
    %122 = vmatprep.subr.mxu0 0.0
    %123 = vmatpush1.msra.mxu0 0.0
    %124 = vmatprep.subr.mxu0 0.0
    %125 = vmatpush1.msra.mxu0 0.0
    %126 = vmatprep.subr.mxu0 0.0
    %127 = vmatpush1.msra.mxu0 0.0
    %128 = vmatprep.subr.mxu0 0.0
    %129 = vmatpush1.msra.mxu0 0.0
    %130 = vmatprep.subr.mxu0 0.0
    %131 = vmatpush1.msra.mxu0 0.0
    %132 = vmatprep.subr.mxu0 0.0
    %133 = vmatpush1.msra.mxu0 0.0
    %134 = vmatprep.subr.mxu0 0.0
    %135 = vmatpush1.msra.mxu0 0.0
    %136 = vmatprep.mubr.f32.mxu0 0.0
    %137 = vmatmul.mubr.f32.gmra.mrb[0].mxu0 %v67
    %v138 = vpop.f32.mrb[0].mxu0
    %v139 = vadd.f32 %v63, %v138
    %v140 = vpop.f32.mrb[0].mxu0
    %141 = vmatprep.mubr.f32.mxu0 0.0
    %142 = vmatmul.mubr.f32.gmra.mrb[0].mxu0 %v70
    %v143 = vpop.f32.mrb[0].mxu0
    %v144 = vadd.f32 %v63, %v143
    %v145 = vpop.f32.mrb[0].mxu0
    %146 = vdwg.mxu0
    %147 = vmax.xlane.f32.xlu0 %v139
    %v148 = vpop.xlane.xlu0 %147
    %149 = vmax.xlane.f32.xlu0 %v144
    %v150 = vpop.xlane.xlu0 %149
    %v151 = vsub.f32 %v139, %v148
    %v152 = vsub.f32 %v144, %v150
    %v153 = vmul.f32 %v151, 1.442695
    %v154 = vpow.pop %v153
    %v155 = vmul.f32 %v152, 1.442695
    %v156 = vpow.pop %v155
    %157 = vadd.xlane.f32.xlu0 %v154
    %v158 = vpop.xlane.xlu0 %157
    %159 = vadd.xlane.f32.xlu0 %v156
    %v160 = vpop.xlane.xlu0 %159
    %v161 = vlaneseq
    %v162 = vand.u32 %v161, 127
    %v163 = vstv 0
    %vm164 = vcmp.eq.s32.totalorder %v162, %v163
    %v165 = vld [vmem:[#allocation2] sm:$0xff]
    %v166 = vld [vmem:[#allocation2 + $0x8] sm:$0xff]
    %v167 = vsel %vm164, %v148, %v165
    %v168 = vsel %vm164, %v150, %v166
    %vm169 = vcmask 7168
    %170 = vst.msk [vmem:[#allocation2] sm:$0xff] %vm169, %v167
    %171 = vst.msk [vmem:[#allocation2 + $0x8] sm:$0xff] %vm169, %v168
    %v172 = vld [vmem:[#allocation3] sm:$0xff]
    %v173 = vld [vmem:[#allocation3 + $0x8] sm:$0xff]
    %v174 = vsel %vm164, %v158, %v172
    %v175 = vsel %vm164, %v160, %v173
    %176 = vst.msk [vmem:[#allocation3] sm:$0xff] %vm169, %v174
    %177 = vst.msk [vmem:[#allocation3 + $0x8] sm:$0xff] %vm169, %v175
    %s178 = smul.u32 0, 128
    %s179 = sshra.s32 %s178, 7
    %s180 = sand.u32 %s178, 127
    %s181 = scalar_lea.vmem [#allocation9], %s179
    %182 = vst [vmem:[%s181] sm:$0xff] %v154
    %183 = vst [vmem:[%s181 + $0x8] sm:$0xff] %v156
    // Predicated region
    $region26: #{tpu_custom_call.1} parent=1 // pred_check
      %p184 = pneg %p43
    $region27: #{tpu_custom_call.1} parent=1 // pred_check_branch
      %186 = sbr.rel (%p184) target = $region29
    $region28: #{tpu_custom_call.1} parent=1 // pred_region
      %v187 = vld [vmem:[#allocation2] sm:$0xff]
      %v188 = vld [vmem:[#allocation2 + $0x8] sm:$0xff]
      %v189 = vld [vmem:[#allocation3] sm:$0xff]
      %v190 = vld [vmem:[#allocation3 + $0x8] sm:$0xff]
      %v191 = vsub.f32 %v187, %v187
      %v192 = vsub.f32 %v188, %v188
      %v193 = vmul.f32 %v191, 1.442695
      %v194 = vpow.pop %v193
      %v195 = vmul.f32 %v192, 1.442695
      %v196 = vpow.pop %v195
      %v197 = vmul.f32 %v189, %v194
      %v198 = vmul.f32 %v190, %v196
      %v199 = vadd.f32 %v197, 0.0
      %v200 = vadd.f32 %v198, 0.0
      %v201 = vrcp.pop %v199
      %v202 = vmul.f32 1.0, %v201
      %v203 = vrcp.pop %v200
      %v204 = vmul.f32 1.0, %v203
      %v205 = vmul.f32 %v194, %v202
      %v206 = vmul.f32 %v196, %v204
      %v207 = vld [vmem:[#allocation9] sm:$0xff]
      %v208 = vld [vmem:[#allocation9 + $0x8] sm:$0xff]
      %210 = vset.pattern.permute.xlu0 0
      %211 = vperm.xlu0 %210, %v205
      %v212 = vpop.permute.xlu0 %211
      %215 = vset.pattern.permute.xlu0 0
      %216 = vperm.xlu0 %215, %v206
      %v217 = vpop.permute.xlu0 %216
      %v219 = vmul.f32 %v207, %v212
      %v220 = vmul.f32 %v208, %v217
      %221 = vst [vmem:[#allocation9] sm:$0xff] %v219
      %222 = vst [vmem:[#allocation9 + $0x8] sm:$0xff] %v220
    $region29: #{tpu_custom_call.1} parent=1 // pred_fallthru
      _
    // Predicated region
    $region30: #{tpu_custom_call.1} parent=1 // pred_check
      _
    $region31: #{tpu_custom_call.1} parent=1 // pred_check_branch
      %224 = sbr.rel (0) target = $region33
    $region32: #{tpu_custom_call.1} parent=1 // pred_region
      %s226 = ssub.s32 256, 256
      %227 = vsyncadd [#allocation6], %s226
      %s228 = sshll.u32 [#allocation9], 4
      %s229 = int_to_ptr.vmem [resolvable:$true] %s228
      %234 = dma.vmem_to_hbm [thread:$0]  %s229, 256, %s3, [#allocation6], 128, 128, 8
    $region33: #{tpu_custom_call.1} parent=1 // pred_fallthru
      _
    // Predicated region
    $region34: #{tpu_custom_call.1} parent=1 // pred_check
      _
    $region35: #{tpu_custom_call.1} parent=1 // pred_check_branch
      %236 = sbr.rel (0) target = $region37
    $region36: #{tpu_custom_call.1} parent=1 // pred_region
      %237 = dma.done [#allocation6], 256
    $region37: #{tpu_custom_call.1} parent=1 // pred_fallthru
      _
    %238 = vsyncpa [#allocation5], 1
    %239 = vsyncpa [#allocation8], 1
    %240 = vsyncpa [#allocation6], 1

</llo_original>
